<compile_context>
chip_gen: v7x
topology: tpu7x:2x2x1
jax: 0.10.0
libtpu: 0.0.40
codegen_flags: <defaults>
</compile_context>

<pallas_src>
import functools

import jax
import jax.numpy as jnp
from jax.experimental import pallas as pl
from jax.experimental.pallas import tpu as pltpu


def _cdiv(a, b):
    return -(-a // b)


def _round_up(a, b):
    return _cdiv(a, b) * b


def _sublane_multiple(dtype):
    # Rows per native sublane tile: f32 -> 8, bf16/f16 -> 16, int8/fp8 -> 32.
    return max(8, 32 // jnp.dtype(dtype).itemsize)


def _vmem_capacity_bytes():
    try:
        return int(pltpu.get_tpu_info().vmem_capacity_bytes)
    except Exception:
        return 64 * 1024 * 1024  # conservative fallback: v7x per-TC VMEM


def _default_num_shards():
    # A 2-way "parallel" shard axis only pays off on megacore chips (2 TCs per
    # chip, e.g. v7x / v4 / v5p).  On single-TC v5e/v6e it is just a serial
    # loop with extra finalize/writeback steps, so default to 1 there.
    try:
        kind = jax.devices()[0].device_kind.lower()
    except Exception:
        return 1
    if "v7" in kind or "7x" in kind or "v4" in kind or "v5p" in kind:
        return 2
    return 1


def _pick_tile_n(n, c, itemsize, budget, mult):
    """Largest sublane-aligned row tile whose full VMEM footprint fits budget."""
    c_pad = _round_up(c, 128)  # Mosaic pads the lane (last) dim to 128
    # Per-row VMEM footprint (bytes):
    #   2x double-buffered logits blocks (lane-padded C)
    #   2x double-buffered (tile_n, 1) int32 targets blocks (lane-padded to 128)
    #   1x (tile_n, 1) f32 accumulator scratch (lane-padded to 128)
    #   ~5 live f32 (tile_n, c_pad) temporaries (x, e, iota, masked-e, loss path)
    bytes_per_row = 2 * c_pad * itemsize + 2 * 128 * 4 + 128 * 4 + 5 * c_pad * 4
    t = budget // max(1, bytes_per_row)
    # Keep one (padded) logits block <= 8 MiB: DMA time then dwarfs the
    # ~0.35 us per-grid-step overhead while staying comfortably pipelineable.
    t = min(t, (8 * 1024 * 1024) // (c_pad * itemsize))
    t = min(t, _round_up(n, mult))
    t = max(mult, (t // mult) * mult)
    return int(t)


def _dsc_loss_kernel(logits_ref, targets_ref, out_ref, acc_ref, *,
                     alpha, smooth, n_true, tile_n, tiles_per_shard):
    s = pl.program_id(0)   # shard ("parallel" axis -> megacore split on v7x)
    i = pl.program_id(1)   # tile within shard ("arbitrary" reduction axis)

    @pl.when(i == 0)
    def _init():
        acc_ref[...] = jnp.zeros_like(acc_ref)

    block_idx = s * tiles_per_shard + i
    row0 = block_idx * tile_n

    # Tiles entirely past the true N (shard rounding) are skipped; their DMA
    # was clamped to the last valid block by the index_map.
    @pl.when(row0 < n_true)
    def _compute():
        x = logits_ref[...].astype(jnp.float32)               # (TILE_N, C)
        tn, c = x.shape

        # Row-wise softmax numerator/denominator without materializing the
        # normalized probabilities or a one-hot matrix.
        m = jnp.max(x, axis=1, keepdims=True)                 # (TILE_N, 1)
        e = jnp.exp(x - m)                                    # (TILE_N, C)
        denom = jnp.sum(e, axis=1, keepdims=True)             # (TILE_N, 1)

        col = jax.lax.broadcasted_iota(jnp.int32, (tn, c), 1)
        tgt = targets_ref[...]                                # (TILE_N, 1) int32
        num = jnp.sum(jnp.where(col == tgt, e, 0.0), axis=1, keepdims=True)

        # Exact divide on the narrow column keeps 1e-5 accuracy cheaply.
        p = num / denom                                       # (TILE_N, 1)

        # Self-adjusting dice loss per example; alpha specialised at trace time.
        one_minus = 1.0 - p
        if alpha == 1.0:
            w = one_minus
        elif alpha == 2.0:
            w = one_minus * one_minus
        else:
            w = jnp.power(one_minus, alpha)
        pwf = w * p
        loss = 1.0 - (2.0 * pwf + smooth) / (pwf + 1.0 + smooth)  # (TILE_N, 1)

        # Mask rows that are padding / ragged-tail garbage (global row >= N).
        row = row0 + jax.lax.broadcasted_iota(jnp.int32, (tn, 1), 0)
        loss = jnp.where(row < n_true, loss, 0.0)

        # Pure elementwise VPU accumulate; no per-iteration reduction or
        # vector->scalar->SMEM round-trip.
        acc_ref[...] += loss

    @pl.when(i == tiles_per_shard - 1)
    def _finalize():
        total = jnp.sum(acc_ref[...], axis=0, keepdims=True)     # (1, 1)
        # Lane-dense (1, 8, 128) block write; wrapper reads element [s, 0, 0].
        out_ref[...] = jnp.broadcast_to(total.reshape(1, 1, 1), out_ref.shape)


def multi_dsc_loss(logits, targets, *, alpha=1.0, smooth=1.0, reduction="mean",
                   tile_n=None, num_shards=None):
    """Pallas TPU implementation of MultiDSCLoss(alpha, smooth, reduction)."""
    if reduction not in ("mean", "sum"):
        # TODO(synk): reduction='none' (per-row loss output) not implemented in the kernel.
        raise NotImplementedError(f"Reduction `{reduction}` is not supported.")

    n, c = logits.shape
    targets_2d = targets.astype(jnp.int32).reshape(n, 1)

    itemsize = jnp.dtype(logits.dtype).itemsize
    mult = _sublane_multiple(logits.dtype)

    # Generation-aware VMEM budget: <= 48 MiB limit on v7x (64 MiB physical),
    # larger on v5e/v6e (128 MiB physical); tiles sized against ~70% of it.
    vmem_cap = _vmem_capacity_bytes()
    vmem_limit = min(vmem_cap * 3 // 4, 100 * 1024 * 1024)
    tile_budget = int(vmem_limit * 0.7)

    if tile_n is None:
        tile_n = _pick_tile_n(n, c, itemsize, tile_budget, mult)
    tile_n = int(min(max(mult, (tile_n // mult) * mult), _round_up(n, mult)))

    tiles = _cdiv(n, tile_n)
    if num_shards is None:
        num_shards = _default_num_shards()
    num_shards = int(max(1, min(num_shards, tiles)))
    tiles_per_shard = _cdiv(tiles, num_shards)
    last_block = tiles - 1

    # No jnp.pad: the ragged tail is a partial edge block (masked in-kernel),
    # and blocks past the end re-read the last in-bounds block via the clamp.
    def _in_map(s, i):
        return (jnp.minimum(s * tiles_per_shard + i, last_block), 0)

    kernel = functools.partial(
        _dsc_loss_kernel,
        alpha=float(alpha), smooth=float(smooth),
        n_true=n, tile_n=tile_n, tiles_per_shard=tiles_per_shard)

    c_pad = _round_up(c, 128)
    cost = pl.CostEstimate(
        flops=8 * n * c,
        transcendentals=n * c,
        bytes_accessed=n * (c * itemsize + 4) + num_shards * 8 * 128 * 4)

    out = pl.pallas_call(
        kernel,
        out_shape=jax.ShapeDtypeStruct((num_shards, 8, 128), jnp.float32),
        grid_spec=pltpu.PrefetchScalarGridSpec(
            num_scalar_prefetch=0,
            grid=(num_shards, tiles_per_shard),
            in_specs=[
                pl.BlockSpec((tile_n, c), _in_map),
                pl.BlockSpec((tile_n, 1), _in_map),
            ],
            out_specs=pl.BlockSpec((1, 8, 128), lambda s, i: (s, 0, 0)),
            scratch_shapes=[pltpu.VMEM((tile_n, 1), jnp.float32)],
        ),
        compiler_params=pltpu.CompilerParams(
            dimension_semantics=("parallel", "arbitrary"),
            vmem_limit_bytes=int(vmem_limit),
        ),
        cost_estimate=cost,
    )(logits, targets_2d)

    total = jnp.sum(out[:, 0, 0])
    if reduction == "mean":
        return total / jnp.float32(n)
    return total


def _reference(logits, targets, alpha=1.0, smooth=1.0, reduction="mean"):
    # Pure-JAX reference mirroring the PyTorch forward.
    probs = jax.nn.softmax(logits.astype(jnp.float32), axis=1)
    p = jnp.take_along_axis(probs, targets[:, None], axis=1)
    pwf = (1.0 - p) ** alpha * p
    loss = 1.0 - (2.0 * pwf + smooth) / (pwf + 1.0 + smooth)
    return jnp.mean(loss) if reduction == "mean" else jnp.sum(loss)


if __name__ == "__main__":
    key = jax.random.PRNGKey(0)
    k1, k2 = jax.random.split(key)

    # Case 1: small (batch, num_classes) matching the module spec, default tiling.
    N, C = 8, 32
    logits = jax.random.normal(k1, (N, C), dtype=jnp.float32)
    targets = jax.random.randint(k2, (N,), 0, C, dtype=jnp.int32)

    loss = jax.block_until_ready(
        multi_dsc_loss(logits, targets, alpha=1.0, smooth=1.0))
    ref = _reference(logits, targets, alpha=1.0, smooth=1.0)
    assert jnp.allclose(loss, ref, atol=1e-5, rtol=1e-5), (loss, ref)

    # Case 2: exercises N-tiling, the ragged (un-padded) tail, the clamped
    # index_map + pl.when skip for the excess shard block, the 2-shard
    # "parallel" axis, and the alpha != 1 branch.
    N2, C2 = 100, 32
    k3, k4 = jax.random.split(k2)
    logits2 = jax.random.normal(k3, (N2, C2), dtype=jnp.float32)
    targets2 = jax.random.randint(k4, (N2,), 0, C2, dtype=jnp.int32)

    loss2 = jax.block_until_ready(
        multi_dsc_loss(logits2, targets2, alpha=2.0, smooth=1.0,
                       tile_n=16, num_shards=2))
    ref2 = _reference(logits2, targets2, alpha=2.0, smooth=1.0)
    assert jnp.allclose(loss2, ref2, atol=1e-5, rtol=1e-5), (loss2, ref2)

    # Case 3: bf16 logits (sublane multiple 16), non-power-of-2 class count,
    # reduction='sum'.
    N3, C3 = 64, 10
    k5, k6 = jax.random.split(k4)
    logits3 = jax.random.normal(k5, (N3, C3), dtype=jnp.bfloat16)
    targets3 = jax.random.randint(k6, (N3,), 0, C3, dtype=jnp.int32)

    loss3 = jax.block_until_ready(
        multi_dsc_loss(logits3, targets3, alpha=1.0, smooth=1.0,
                       reduction="sum"))
    ref3 = _reference(logits3, targets3, alpha=1.0, smooth=1.0, reduction="sum")
    assert jnp.allclose(loss3, ref3, atol=1e-4, rtol=1e-4), (loss3, ref3)

    print("KERNEL_OK")
</pallas_src>

<mosaic_0001>
module attributes {stable_mosaic.version = 11 : i64} {
  func.func @_dsc_loss_kernel(%arg0: i32, %arg1: i32, %arg2: memref<8x32xf32, #tpu.memory_space<vmem>>, %arg3: memref<8x1xi32, #tpu.memory_space<vmem>>, %arg4: memref<1x8x128xf32, #tpu.memory_space<vmem>>, %arg5: memref<8x1xf32, #tpu.memory_space<vmem>>) attributes {dimension_semantics = [#tpu.dimension_semantics<parallel>, #tpu.dimension_semantics<arbitrary>], iteration_bounds = array<i64: 1, 1>, scalar_prefetch = 0 : i64, scratch_operands = 1 : i64, tpu.core_type = #tpu.core_type<tc>, window_params = [{transform_indices = @transform_0, window_bounds = array<i64: 8, 32>}, {transform_indices = @transform_1, window_bounds = array<i64: 8, 1>}, {transform_indices = @transform_2, window_bounds = array<i64: 1, 8, 128>}]} {
    %c0_i32 = arith.constant 0 : i32
    %0 = arith.cmpi eq, %arg1, %c0_i32 : i32
    %1 = arith.extui %0 : i1 to i32
    %c0_i32_0 = arith.constant 0 : i32
    %2 = arith.cmpi ne, %1, %c0_i32_0 : i32
    scf.if %2 {
      %cst = arith.constant 0.000000e+00 : f32
      %12 = vector.broadcast %cst : f32 to vector<8x1xf32>
      %c0 = arith.constant 0 : index
      %c0_5 = arith.constant 0 : index
      %13 = vector.load %arg5[%c0, %c0_5] : memref<8x1xf32, #tpu.memory_space<vmem>>, vector<8x1xf32>
      tpu.vector_store %arg5[%c0, %c0_5], %12 {strides = array<i32>} : memref<8x1xf32, #tpu.memory_space<vmem>>, vector<8x1xf32>,
    } else {
    }
    %c1_i32 = arith.constant 1 : i32
    %3 = arith.muli %arg0, %c1_i32 : i32
    %4 = arith.addi %3, %arg1 : i32
    %c8_i32 = arith.constant 8 : i32
    %5 = arith.muli %4, %c8_i32 : i32
    %c8_i32_1 = arith.constant 8 : i32
    %6 = arith.cmpi slt, %5, %c8_i32_1 : i32
    %7 = arith.extui %6 : i1 to i32
    %c0_i32_2 = arith.constant 0 : i32
    %8 = arith.cmpi ne, %7, %c0_i32_2 : i32
    scf.if %8 {
      %c0 = arith.constant 0 : index
      %c0_5 = arith.constant 0 : index
      %12 = vector.load %arg2[%c0, %c0_5] : memref<8x32xf32, #tpu.memory_space<vmem>>, vector<8x32xf32>
      %cst = arith.constant dense<0xFF800000> : vector<8xf32>
      %13 = vector.multi_reduction <maximumf>, %12, %cst [1] : vector<8x32xf32> to vector<8xf32>
      %14 = vector.shape_cast %13 : vector<8xf32> to vector<8x1xf32>
      %15 = vector.broadcast %14 : vector<8x1xf32> to vector<8x32xf32>
      %16 = arith.subf %12, %15 : vector<8x32xf32>
      %17 = math.exp %16 : vector<8x32xf32>
      %cst_6 = arith.constant dense<0.000000e+00> : vector<8xf32>
      %18 = vector.multi_reduction <add>, %17, %cst_6 [1] : vector<8x32xf32> to vector<8xf32>
      %19 = vector.shape_cast %18 : vector<8xf32> to vector<8x1xf32>
      %20 = tpu.iota {dimensions = array<i32: 1>} : vector<8x32xi32>
      %c0_7 = arith.constant 0 : index
      %c0_8 = arith.constant 0 : index
      %21 = vector.load %arg3[%c0_7, %c0_8] : memref<8x1xi32, #tpu.memory_space<vmem>>, vector<8x1xi32>
      %22 = vector.broadcast %21 : vector<8x1xi32> to vector<8x32xi32>
      %23 = arith.cmpi eq, %20, %22 : vector<8x32xi32>
      %cst_9 = arith.constant 0.000000e+00 : f32
      %24 = vector.broadcast %cst_9 : f32 to vector<8x32xf32>
      %25 = arith.select %23, %17, %24 : vector<8x32xi1>, vector<8x32xf32>
      %cst_10 = arith.constant dense<0.000000e+00> : vector<8xf32>
      %26 = vector.multi_reduction <add>, %25, %cst_10 [1] : vector<8x32xf32> to vector<8xf32>
      %27 = vector.shape_cast %26 : vector<8xf32> to vector<8x1xf32>
      %28 = arith.divf %27, %19 : vector<8x1xf32>
      %cst_11 = arith.constant 1.000000e+00 : f32
      %29 = vector.broadcast %cst_11 : f32 to vector<8x1xf32>
      %30 = arith.subf %29, %28 : vector<8x1xf32>
      %31 = arith.mulf %30, %28 : vector<8x1xf32>
      %cst_12 = arith.constant 2.000000e+00 : f32
      %32 = vector.broadcast %cst_12 : f32 to vector<8x1xf32>
      %33 = arith.mulf %32, %31 : vector<8x1xf32>
      %cst_13 = arith.constant 1.000000e+00 : f32
      %34 = vector.broadcast %cst_13 : f32 to vector<8x1xf32>
      %35 = arith.addf %33, %34 : vector<8x1xf32>
      %cst_14 = arith.constant 1.000000e+00 : f32
      %36 = vector.broadcast %cst_14 : f32 to vector<8x1xf32>
      %37 = arith.addf %31, %36 : vector<8x1xf32>
      %cst_15 = arith.constant 1.000000e+00 : f32
      %38 = vector.broadcast %cst_15 : f32 to vector<8x1xf32>
      %39 = arith.addf %37, %38 : vector<8x1xf32>
      %40 = arith.divf %35, %39 : vector<8x1xf32>
      %cst_16 = arith.constant 1.000000e+00 : f32
      %41 = vector.broadcast %cst_16 : f32 to vector<8x1xf32>
      %42 = arith.subf %41, %40 : vector<8x1xf32>
      %43 = tpu.iota {dimensions = array<i32: 0>} : vector<8x1xi32>
      %44 = vector.broadcast %5 : i32 to vector<8x1xi32>
      %45 = arith.addi %44, %43 : vector<8x1xi32>
      %c8_i32_17 = arith.constant 8 : i32
      %46 = vector.broadcast %c8_i32_17 : i32 to vector<8x1xi32>
      %47 = arith.cmpi slt, %45, %46 : vector<8x1xi32>
      %cst_18 = arith.constant 0.000000e+00 : f32
      %48 = vector.broadcast %cst_18 : f32 to vector<8x1xf32>
      %49 = arith.select %47, %42, %48 : vector<8x1xi1>, vector<8x1xf32>
      %c0_19 = arith.constant 0 : index
      %c0_20 = arith.constant 0 : index
      %50 = vector.load %arg5[%c0_19, %c0_20] : memref<8x1xf32, #tpu.memory_space<vmem>>, vector<8x1xf32>
      %51 = arith.addf %50, %49 : vector<8x1xf32>
      %c0_21 = arith.constant 0 : index
      %c0_22 = arith.constant 0 : index
      %52 = vector.load %arg5[%c0_21, %c0_22] : memref<8x1xf32, #tpu.memory_space<vmem>>, vector<8x1xf32>
      tpu.vector_store %arg5[%c0_21, %c0_22], %51 {strides = array<i32>} : memref<8x1xf32, #tpu.memory_space<vmem>>, vector<8x1xf32>,
    } else {
    }
    %c0_i32_3 = arith.constant 0 : i32
    %9 = arith.cmpi eq, %arg1, %c0_i32_3 : i32
    %10 = arith.extui %9 : i1 to i32
    %c0_i32_4 = arith.constant 0 : i32
    %11 = arith.cmpi ne, %10, %c0_i32_4 : i32
    scf.if %11 {
      %c0 = arith.constant 0 : index
      %c0_5 = arith.constant 0 : index
      %12 = vector.load %arg5[%c0, %c0_5] : memref<8x1xf32, #tpu.memory_space<vmem>>, vector<8x1xf32>
      %cst = arith.constant dense<0.000000e+00> : vector<1xf32>
      %13 = vector.multi_reduction <add>, %12, %cst [0] : vector<8x1xf32> to vector<1xf32>
      %14 = vector.shape_cast %13 : vector<1xf32> to vector<1x1xf32>
      %15 = vector.shape_cast %14 : vector<1x1xf32> to vector<1x1x1xf32>
      %16 = vector.shape_cast %15 : vector<1x1x1xf32> to vector<1x1x1xf32>
      %17 = vector.broadcast %16 : vector<1x1x1xf32> to vector<1x8x128xf32>
      %c0_6 = arith.constant 0 : index
      %c0_7 = arith.constant 0 : index
      %c0_8 = arith.constant 0 : index
      %18 = vector.load %arg4[%c0_6, %c0_7, %c0_8] : memref<1x8x128xf32, #tpu.memory_space<vmem>>, vector<1x8x128xf32>
      tpu.vector_store %arg4[%c0_6, %c0_7, %c0_8], %17 {strides = array<i32>} : memref<1x8x128xf32, #tpu.memory_space<vmem>>, vector<1x8x128xf32>,
    } else {
    }
    return
  }
  func.func @transform_0(%arg0: i32, %arg1: i32) -> (i32, i32) {
    %c1_i32 = arith.constant 1 : i32
    %0 = arith.muli %arg0, %c1_i32 : i32
    %1 = arith.addi %0, %arg1 : i32
    %c0_i32 = arith.constant 0 : i32
    %2 = arith.minsi %1, %c0_i32 : i32
    %c0_i32_0 = arith.constant 0 : i32
    %c0_i32_1 = arith.constant 0 : i32
    return %2, %c0_i32_0 : i32, i32
  }
  func.func @transform_1(%arg0: i32, %arg1: i32) -> (i32, i32) {
    %c1_i32 = arith.constant 1 : i32
    %0 = arith.muli %arg0, %c1_i32 : i32
    %1 = arith.addi %0, %arg1 : i32
    %c0_i32 = arith.constant 0 : i32
    %2 = arith.minsi %1, %c0_i32 : i32
    %c0_i32_0 = arith.constant 0 : i32
    %c0_i32_1 = arith.constant 0 : i32
    return %2, %c0_i32_0 : i32, i32
  }
  func.func @transform_2(%arg0: i32, %arg1: i32) -> (i32, i32, i32) {
    %c0_i32 = arith.constant 0 : i32
    %c0_i32_0 = arith.constant 0 : i32
    %c0_i32_1 = arith.constant 0 : i32
    return %arg0, %c0_i32, %c0_i32_0 : i32, i32, i32
  }
}

</mosaic_0001>

<llo_original>
// kernel: tpu_custom_call.1
$region0: #{tpu_custom_call.1}
  #allocation0 [shape = 'u32[]', space=smem, size = 0x4, offset = 0x4, fixed_abs, tag = 'smem constant byte address 0x4 - core index']
  #allocation1 [shape = 'u32[144,128]{1,0:T(1,128)}', space=vmem, size = 0x12000, scoped, tag = 'internal scratch']
  #allocation2 [shape = 'f32[8,1]{1,0:T(8,128)}', space=vmem, size = 0x1000, scoped, tag = 'scratch operand']
  %s0 = inlined_call_operand.vmem [shape: f32[8,32], index: 0, kind: input, shape index: {}]
  %s1 = inlined_call_operand.vmem [shape: s32[8,1], index: 1, kind: input, shape index: {}]
  %s2 = inlined_call_operand.hbm [shape: f32[1,8,128], index: 2, kind: output, shape index: {}]
  %s3 = sld [smem:[#allocation0]]
  $region30: #{tpu_custom_call.1} parent=0
    _
  %s5 = ssub.s32 1, %s3
  %s6 = scalar_select 0, %s5, %s3
  $region1: #{tpu_custom_call.1} parent=0
    #allocation3 [shape = 'u8[4096]{0}', space=vmem, size = 0x1000, scoped, tag = 'output window, operand 0, single buffered']
    #allocation4 [shape = 's32[1]{0}', space=sflag, size = 0x4, scoped, tag = 'scoped memory for tpu_custom_call.1']
    %7 = vsyncpa [#allocation4], 0
    // Predicated region
    $region2: #{tpu_custom_call.1} parent=1 // pred_check
      _
    $region3: #{tpu_custom_call.1} parent=1 // pred_check_branch
      %9 = sbr.rel (0) target = $region5
    $region4: #{tpu_custom_call.1} parent=1 // pred_region
      %s10 = sadd.s32 0, 0
      %p11 = scmp.lt.s32.totalorder %s10, 0
      %s12 = scalar_select %p11, %s10, 0
      %p13 = scmp.lt.s32.totalorder %s12, 0
      %s14 = scalar_select %p13, %s12, 0
      %s15 = smul.addr %s14, 8
      %s16 = scalar_lea.vmem %s0, %s15
      %s17 = sadd.s32 0, 0
      %p18 = scmp.lt.s32.totalorder %s17, 0
      %s19 = scalar_select %p18, %s17, 0
    $region5: #{tpu_custom_call.1} parent=1 // pred_fallthru
      _
    // Predicated region
    $region6: #{tpu_custom_call.1} parent=1 // pred_check
      _
    $region7: #{tpu_custom_call.1} parent=1 // pred_check_branch
      %21 = sbr.rel (0) target = $region9
    $region8: #{tpu_custom_call.1} parent=1 // pred_region
      %s22 = sadd.s32 0, 0
      %p23 = scmp.lt.s32.totalorder %s22, 0
      %s24 = scalar_select %p23, %s22, 0
      %p25 = scmp.lt.s32.totalorder %s24, 0
      %s26 = scalar_select %p25, %s24, 0
      %s27 = smul.addr %s26, 8
      %s28 = scalar_lea.vmem %s1, %s27
      %s29 = sadd.s32 0, 0
      %p30 = scmp.lt.s32.totalorder %s29, 0
      %s31 = scalar_select %p30, %s29, 0
    $region9: #{tpu_custom_call.1} parent=1 // pred_fallthru
      _
    %s32 = sadd.s32 0, 0
    %p33 = scmp.lt.s32.totalorder %s32, 0
    %s34 = scalar_select %p33, %s32, 0
    %p35 = scmp.lt.s32.totalorder %s34, 0
    %s36 = scalar_select %p35, %s34, 0
    %s37 = smul.addr %s36, 8
    %s38 = scalar_lea.vmem %s0, %s37
    %s39 = sadd.s32 0, 0
    %p40 = scmp.lt.s32.totalorder %s39, 0
    %s41 = scalar_select %p40, %s39, 0
    %p42 = scmp.lt.s32.totalorder %s41, 0
    %s43 = scalar_select %p42, %s41, 0
    %s44 = smul.addr %s43, 8
    %s45 = scalar_lea.vmem %s1, %s44
    %s46 = sadd.s32 0, 0
    %p47 = scmp.lt.s32.totalorder %s46, 0
    %s48 = scalar_select %p47, %s46, 0
    %p49 = scmp.lt.s32.totalorder %s48, 0
    %s50 = scalar_select %p49, %s48, 0
    %s51 = smul.addr %s50, 8
    %s52 = scalar_lea.vmem %s0, %s51
    %s53 = sadd.s32 0, 0
    %p54 = scmp.lt.s32.totalorder %s53, 0
    %s55 = scalar_select %p54, %s53, 0
    %s56 = sadd.s32 0, 0
    %p57 = scmp.lt.s32.totalorder %s56, 0
    %s58 = scalar_select %p57, %s56, 0
    %p59 = scmp.lt.s32.totalorder %s58, 0
    %s60 = scalar_select %p59, %s58, 0
    %s61 = smul.addr %s60, 8
    %s62 = scalar_lea.vmem %s1, %s61
    %s63 = sadd.s32 0, 0
    %p64 = scmp.lt.s32.totalorder %s63, 0
    %s65 = scalar_select %p64, %s63, 0
    %p66 = scmp.eq.s32.totalorder 0, 0
    // Predicated region
    $region10: #{tpu_custom_call.1} parent=1 // pred_check
      %p67 = pneg %p66
    $region11: #{tpu_custom_call.1} parent=1 // pred_check_branch
      %69 = sbr.rel (%p67) target = $region13
    $region12: #{tpu_custom_call.1} parent=1 // pred_region
      %vm70 = vcmask 7168
      %71 = vst.msk [vmem:[#allocation2] sm:$0xff] %vm70, 0.0
    $region13: #{tpu_custom_call.1} parent=1 // pred_fallthru
      _
    %s72 = sadd.s32 0, 0
    %s73 = smul.u32 %s72, 8
    %p74 = scmp.lt.s32.totalorder %s73, 8
    // Predicated region
    $region14: #{tpu_custom_call.1} parent=1 // pred_check
      %p75 = pneg %p74
    $region15: #{tpu_custom_call.1} parent=1 // pred_check_branch
      %77 = sbr.rel (%p75) target = $region17
    $region16: #{tpu_custom_call.1} parent=1 // pred_region
      %v78 = vld [vmem:[%s52] sm:$0xff]
      %vm79 = vcmask 261120
      %v80 = vsel %vm79, %v78, -inf
      %81 = vmax.xlane.f32.xlu0 %v80
      %v82 = vpop.xlane.xlu0 %81
      %v83 = vsub.f32 %v78, %v82
      %v84 = vmul.f32 %v83, 1.442695
      %v85 = vpow.pop %v84
      %v86 = vsel %vm79, %v85, 0.0
      %87 = vadd.xlane.f32.xlu0 %v86
      %v88 = vpop.xlane.xlu0 %87
      %v89 = vlaneseq
      %v90 = vand.u32 %v89, 127
      %v91 = vld [vmem:[%s62] sm:$0xff]
      %92 = vset.pattern.permute.xlu0 0
      %93 = vperm.xlu0 %92, %v91
      %v94 = vpop.permute.xlu0 %93
      %vm95 = vcmp.eq.s32.totalorder %v90, %v94
      %v96 = vsel %vm95, %v85, 0.0
      %v97 = vsel %vm79, %v96, 0.0
      %98 = vadd.xlane.f32.xlu0 %v97
      %v99 = vpop.xlane.xlu0 %98
      %v100 = vrcp.pop %v88
      %v101 = vmul.f32 %v99, %v100
      %v102 = vsub.f32 1.0, %v101
      %v103 = vmul.f32 %v102, %v101
      %v104 = vmul.f32 %v103, 2.0
      %v105 = vadd.f32 %v104, 1.0
      %v106 = vadd.f32 %v103, 1.0
      %v107 = vadd.f32 %v106, 1.0
      %v108 = vrcp.pop %v107
      %v109 = vmul.f32 %v105, %v108
      %v110 = vsub.f32 1.0, %v109
      %v111 = vlaneseq
      %v112 = vshrl.u32 %v111, 7
      %v113 = vstv %s73
      %v114 = vadd.s32 %v113, %v112
      %vm115 = vcmp.lt.s32.totalorder %v114, 8
      %v116 = vsel %vm115, %v110, 0.0
      %v117 = vld [vmem:[#allocation2] sm:$0xff]
      %v118 = vadd.f32 %v117, %v116
      %vm119 = vcmask 7168
      %120 = vst.msk [vmem:[#allocation2] sm:$0xff] %vm119, %v118
    $region17: #{tpu_custom_call.1} parent=1 // pred_fallthru
      _
    // Predicated region
    $region18: #{tpu_custom_call.1} parent=1 // pred_check
      %p121 = pneg %p66
    $region19: #{tpu_custom_call.1} parent=1 // pred_check_branch
      %123 = sbr.rel (%p121) target = $region21
    $region20: #{tpu_custom_call.1} parent=1 // pred_region
      %v124 = vld [vmem:[#allocation2] sm:$0xff]
      %vm125 = vcmask 7168
      %v126 = vsel %vm125, %v124, 0.0
      %v127 = vrot.slane %v126, 4
      %v128 = vadd.f32 %v126, %v127
      %v129 = vrot.slane %v128, 2
      %v130 = vadd.f32 %v128, %v129
      %v131 = vrot.slane %v130, 1
      %v132 = vadd.f32 %v130, %v131
      %134 = vset.pattern.permute.xlu0 0
      %135 = vperm.xlu0 %134, %v132
      %v136 = vpop.permute.xlu0 %135
      %138 = vst [vmem:[#allocation3] sm:$0xff] %v136
    $region21: #{tpu_custom_call.1} parent=1 // pred_fallthru
      _
    // Predicated region
    $region22: #{tpu_custom_call.1} parent=1 // pred_check
      _
    $region23: #{tpu_custom_call.1} parent=1 // pred_check_branch
      %140 = sbr.rel (0) target = $region25
    $region24: #{tpu_custom_call.1} parent=1 // pred_region
      %s142 = ssub.s32 128, 128
      %143 = vsyncadd [#allocation4], %s142
      %s145 = sshll.u32 [#allocation3], 4
      %s146 = int_to_ptr.vmem [resolvable:$true] %s145
      %148 = dma.vmem_to_hbm [thread:$0]  %s146, 128, %s2, [#allocation4]
    $region25: #{tpu_custom_call.1} parent=1 // pred_fallthru
      _
    // Predicated region
    $region26: #{tpu_custom_call.1} parent=1 // pred_check
      _
    $region27: #{tpu_custom_call.1} parent=1 // pred_check_branch
      %150 = sbr.rel (0) target = $region29
    $region28: #{tpu_custom_call.1} parent=1 // pred_region
      %151 = dma.done [#allocation4], 128
    $region29: #{tpu_custom_call.1} parent=1 // pred_fallthru
      _
    %152 = vsyncpa [#allocation4], 1

</llo_original>
